<compile_context>
chip_gen: v6e
topology: v6e:2x2x1
jax: 0.10.0
libtpu: 0.0.40
codegen_flags: <defaults>
</compile_context>

<pallas_src>
import jax
import jax.numpy as jnp
import numpy as np
from jax.experimental import pallas as pl
from jax.experimental.pallas import tpu as pltpu

S_CHURN = 40.0
S_TMIN = 0.05
S_TMAX = 999999.0
S_NOISE = 1.003

_NCOEF = 6  # per-step scalars: noise_scale, c_hat, r, a_hat, c_next, a_next


def _make_karras_kernel(n_iters, heun_flags):
    """Build the kernel specialized to (n_iters, per-step Heun on/off flags)."""

    def kernel(coef_ref,                       # SMEM (n_iters*_NCOEF,) f32
               x0_ref, eps_ref, w_ref, b_ref,  # VMEM inputs
               out_ref):                       # VMEM output, written once
        # Resident bf16 weights (8 vregs at D=128).  For much larger D, drive the MXU
        # directly (pltpu.matmul_push_rhs once, matmul_acc_lhs/matmul_pop per call)
        # so W lives in MXU staging registers instead of the vreg file.
        w = w_ref[...]
        # Hoisted bias broadcast (JAX does not CSE broadcast_in_dim).
        b = jnp.broadcast_to(b_ref[...], out_ref.shape)

        def denoise(x, c):
            # Synthetic preconditioned linear denoiser: (c*x) @ W + b.
            # bf16 operands -> single-pass MXU matmul, f32 accumulation.
            lhs = (x * c).astype(jnp.bfloat16)
            return jnp.dot(lhs, w, preferred_element_type=jnp.float32) + b

        # x carried as an SSA value across the statically unrolled steps.
        x = x0_ref[...]
        for i in range(n_iters):
            o = i * _NCOEF
            noise_scale = coef_ref[o + 0]  # s_noise^2 * sqrt(sigma_hat^2 - sigma^2)
            c_hat       = coef_ref[o + 1]  # 1 / (sigma_hat^2 + 1)
            r           = coef_ref[o + 2]  # (sigma_next - sigma_hat) / sigma_hat
            a_hat       = coef_ref[o + 3]  # 0.5 * (sigma_next - sigma_hat) / sigma_hat
            c_next      = coef_ref[o + 4]  # 1 / (sigma_next^2 + 1)
            a_next      = coef_ref[o + 5]  # 0.5 * (sigma_next - sigma_hat) / sigma_next

            x_hat = x + noise_scale * eps_ref[i]
            d_hat = denoise(x_hat, c_hat)
            # Euler: x_hat + (sn - sh) * (x_hat - d_hat)/sh  ==  (1 + r)*x_hat - r*d_hat
            x_euler = (1.0 + r) * x_hat - r * d_hat

            if heun_flags[i]:
                # Heun 2nd-order correction; statically skipped when sigma_next == 0
                # (mirrors `if not torch.all(sigma_next == 0)` in the PyTorch module).
                d_next = denoise(x_euler, c_next)
                x = x_hat + a_hat * (x_hat - d_hat) + a_next * (x_euler - d_next)
            else:
                x = x_euler

        out_ref[...] = x

    return kernel


def karras_sample(noise, w, b, sigmas, eps, num_steps):
    B, D = noise.shape
    n_iters = num_steps - 1
    f32 = jnp.float32

    sigmas = sigmas.astype(f32)
    # gammas = where(s_tmin <= sigma <= s_tmax, min(s_churn/num_steps, sqrt(2)-1), 0)
    gamma_val = min(S_CHURN / num_steps, 0.41421356237309503)
    gammas = jnp.where((sigmas >= S_TMIN) & (sigmas <= S_TMAX), f32(gamma_val), f32(0.0))

    # Precompute all per-step scalar coefficients (tiny, one-time schedule work).
    sig = sigmas[:n_iters]
    sig_next = sigmas[1:num_steps]
    gam = gammas[:n_iters]

    sigma_hat = sig * (gam + 1.0)
    noise_scale = f32(S_NOISE ** 2) * jnp.sqrt(sigma_hat ** 2 - sig ** 2)
    c_hat = 1.0 / (sigma_hat ** 2 + 1.0)
    r = (sig_next - sigma_hat) / sigma_hat
    a_hat = 0.5 * (sig_next - sigma_hat) / sigma_hat
    c_next = 1.0 / (sig_next ** 2 + 1.0)
    safe_sn = jnp.where(sig_next == 0.0, f32(1.0), sig_next)
    a_next = 0.5 * (sig_next - sigma_hat) / safe_sn
    # Flattened 1-D -> SMEM pads to ~256 B (a 2-D (n_iters,6) table pads 8x128 words).
    coefs = jnp.stack([noise_scale, c_hat, r, a_hat, c_next, a_next],
                      axis=-1).reshape(-1).astype(f32)      # (n_iters*_NCOEF,)

    # Heun on/off per step resolved on the host so the Euler-only terminal step is
    # statically peeled.  (The PyTorch `torch.all(sigma_next == 0)` check is likewise
    # an eager, data-dependent host branch.)  If sigmas must remain traced, fall back
    # to a pl.when gate on a prefetched sigma_next.
    heun_flags = tuple(bool(v) for v in (np.asarray(sig_next) != 0.0))

    # x0 = sigmas[0]^2 * noise (one cheap XLA op; matches `sigmas[0].pow(2) * noise`).
    x0 = (sigmas[0] ** 2) * noise.astype(f32)

    grid_spec = pltpu.PrefetchScalarGridSpec(
        num_scalar_prefetch=1,
        grid=(1,),                                  # whole sampling loop in one iteration
        in_specs=[
            pl.BlockSpec((B, D), lambda i, c: (0, 0)),               # x0
            pl.BlockSpec((n_iters, B, D), lambda i, c: (0, 0, 0)),   # eps (fully resident)
            pl.BlockSpec((D, D), lambda i, c: (0, 0)),               # W  (bf16, resident)
            pl.BlockSpec((1, D), lambda i, c: (0, 0)),               # b
        ],
        out_specs=pl.BlockSpec((B, D), lambda i, c: (0, 0)),
    )

    return pl.pallas_call(
        _make_karras_kernel(n_iters, heun_flags),
        out_shape=jax.ShapeDtypeStruct((B, D), f32),
        grid_spec=grid_spec,
        compiler_params=pltpu.CompilerParams(
            dimension_semantics=("arbitrary",),     # sequential; single grid iteration
            # Working set here is ~0.1 MiB; re-derive against v7x's 64 MiB if D grows.
            vmem_limit_bytes=32 * 1024 * 1024,
        ),
    )(coefs, x0, eps.astype(f32), w.astype(jnp.bfloat16), b.astype(f32))


def karras_sample_ref(noise, w, b, sigmas, eps, num_steps):
    """Pure-JAX f32 reference mirroring the PyTorch forward semantics."""
    def denoise_fn(x, s):
        c = 1.0 / (s * s + 1.0)
        return jnp.dot(x * c, w, precision=jax.lax.Precision.HIGHEST) + b

    gamma_val = min(S_CHURN / num_steps, 0.41421356237309503)
    gammas = jnp.where((sigmas >= S_TMIN) & (sigmas <= S_TMAX),
                       jnp.float32(gamma_val), jnp.float32(0.0))
    x = sigmas[0] ** 2 * noise
    for i in range(num_steps - 1):
        sigma, sigma_next, gamma = sigmas[i], sigmas[i + 1], gammas[i]
        e = (S_NOISE ** 2) * eps[i]
        sigma_hat = sigma * (gamma + 1.0)
        x_hat = x + jnp.sqrt(sigma_hat ** 2 - sigma ** 2) * e
        d = (x_hat - denoise_fn(x_hat, sigma_hat)) / sigma_hat
        x_euler = x_hat + (sigma_next - sigma_hat) * d
        safe_sn = jnp.where(sigma_next == 0.0, 1.0, sigma_next)
        d_prime = (x_euler - denoise_fn(x_euler, safe_sn)) / safe_sn
        x_heun = x_hat + (sigma_next - sigma_hat) * 0.5 * (d + d_prime)
        x = jnp.where(sigma_next == 0.0, x_euler, x_heun)
    return x


if __name__ == "__main__":
    key = jax.random.PRNGKey(0)
    B, D = 8, 128
    num_steps = 6

    k_noise, k_w, k_b, k_eps = jax.random.split(key, 4)
    noise = jax.random.normal(k_noise, (B, D), jnp.float32)
    # deterministic synthetic denoiser parameters
    w = (0.5 / jnp.sqrt(jnp.float32(D))) * jax.random.normal(k_w, (D, D), jnp.float32)
    b = 0.01 * jax.random.normal(k_b, (1, D), jnp.float32)
    # per-step Gaussian noise (torch.randn_like equivalent), precomputed for determinism
    eps = jax.random.normal(k_eps, (num_steps - 1, B, D), jnp.float32)
    # Karras-style decreasing sigma schedule ending in 0
    sigmas = jnp.array([10.0, 5.0, 2.0, 1.0, 0.3, 0.0], jnp.float32)

    out = karras_sample(noise, w, b, sigmas, eps, num_steps)
    out = jax.block_until_ready(out)

    ref = karras_sample_ref(noise, w, b, sigmas, eps, num_steps)
    scale = float(jnp.max(jnp.abs(ref)))
    # Tolerance accommodates bf16 MXU operands (f32 accumulate) in the kernel vs. the
    # Precision.HIGHEST f32 reference matmuls, propagated over num_steps-1 steps.
    np.testing.assert_allclose(np.asarray(out), np.asarray(ref),
                               rtol=2e-2, atol=2e-2 * max(scale, 1.0))
    print("KERNEL_OK")
</pallas_src>

<mosaic_0001>
module attributes {stable_mosaic.version = 11 : i64} {
  func.func @kernel(%arg0: i32, %arg1: memref<30xf32, #tpu.memory_space<smem>>, %arg2: memref<8x128xf32, #tpu.memory_space<vmem>>, %arg3: memref<5x8x128xf32, #tpu.memory_space<vmem>>, %arg4: memref<128x128xbf16, #tpu.memory_space<vmem>>, %arg5: memref<1x128xf32, #tpu.memory_space<vmem>>, %arg6: memref<8x128xf32, #tpu.memory_space<vmem>>) attributes {dimension_semantics = [#tpu.dimension_semantics<arbitrary>], iteration_bounds = array<i64: 1>, scalar_prefetch = 1 : i64, scratch_operands = 0 : i64, tpu.core_type = #tpu.core_type<tc>, window_params = [{pipeline_mode = #tpu.pipeline_mode<synchronous>, transform_indices = @transform_0, window_bounds = array<i64: 8, 128>}, {pipeline_mode = #tpu.pipeline_mode<synchronous>, transform_indices = @transform_1, window_bounds = array<i64: 5, 8, 128>}, {pipeline_mode = #tpu.pipeline_mode<synchronous>, transform_indices = @transform_2, window_bounds = array<i64: 128, 128>}, {pipeline_mode = #tpu.pipeline_mode<synchronous>, transform_indices = @transform_3, window_bounds = array<i64: 1, 128>}, {pipeline_mode = #tpu.pipeline_mode<synchronous>, transform_indices = @transform_4, window_bounds = array<i64: 8, 128>}]} {
    %c0 = arith.constant 0 : index
    %c0_0 = arith.constant 0 : index
    %0 = vector.load %arg4[%c0, %c0_0] : memref<128x128xbf16, #tpu.memory_space<vmem>>, vector<128x128xbf16>
    %c0_1 = arith.constant 0 : index
    %c0_2 = arith.constant 0 : index
    %1 = vector.load %arg5[%c0_1, %c0_2] : memref<1x128xf32, #tpu.memory_space<vmem>>, vector<1x128xf32>
    %2 = vector.shape_cast %1 : vector<1x128xf32> to vector<1x128xf32>
    %3 = vector.broadcast %2 : vector<1x128xf32> to vector<8x128xf32>
    %c0_3 = arith.constant 0 : index
    %c0_4 = arith.constant 0 : index
    %4 = vector.load %arg2[%c0_3, %c0_4] : memref<8x128xf32, #tpu.memory_space<vmem>>, vector<8x128xf32>
    %c0_5 = arith.constant 0 : index
    %5 = memref.load %arg1[%c0_5] : memref<30xf32, #tpu.memory_space<smem>>
    %c1 = arith.constant 1 : index
    %6 = memref.load %arg1[%c1] : memref<30xf32, #tpu.memory_space<smem>>
    %c2 = arith.constant 2 : index
    %7 = memref.load %arg1[%c2] : memref<30xf32, #tpu.memory_space<smem>>
    %c3 = arith.constant 3 : index
    %8 = memref.load %arg1[%c3] : memref<30xf32, #tpu.memory_space<smem>>
    %c4 = arith.constant 4 : index
    %9 = memref.load %arg1[%c4] : memref<30xf32, #tpu.memory_space<smem>>
    %c5 = arith.constant 5 : index
    %10 = memref.load %arg1[%c5] : memref<30xf32, #tpu.memory_space<smem>>
    %c0_6 = arith.constant 0 : index
    %c0_7 = arith.constant 0 : index
    %c0_8 = arith.constant 0 : index
    %11 = vector.load %arg3[%c0_6, %c0_7, %c0_8] : memref<5x8x128xf32, #tpu.memory_space<vmem>>, vector<1x8x128xf32>
    %12 = vector.shape_cast %11 : vector<1x8x128xf32> to vector<8x128xf32>
    %13 = vector.broadcast %5 : f32 to vector<8x128xf32>
    %14 = arith.mulf %13, %12 : vector<8x128xf32>
    %15 = arith.addf %4, %14 : vector<8x128xf32>
    %16 = vector.broadcast %6 : f32 to vector<8x128xf32>
    %17 = arith.mulf %15, %16 : vector<8x128xf32>
    %18 = arith.truncf %17 : vector<8x128xf32> to vector<8x128xbf16>
    %cst = arith.constant dense<0.000000e+00> : vector<8x128xf32>
    %19 = tpu.matmul %18, %0, %cst {dimension_numbers = #tpu.dot_dimension_numbers<[1], [0], [0], [1], [0, 0, 1, 1], [], []>} : vector<8x128xbf16>, vector<128x128xbf16>, vector<8x128xf32> -> vector<8x128xf32>
    %20 = arith.addf %19, %3 : vector<8x128xf32>
    %cst_9 = arith.constant 1.000000e+00 : f32
    %21 = arith.addf %cst_9, %7 : f32
    %22 = vector.broadcast %21 : f32 to vector<8x128xf32>
    %23 = arith.mulf %22, %15 : vector<8x128xf32>
    %24 = vector.broadcast %7 : f32 to vector<8x128xf32>
    %25 = arith.mulf %24, %20 : vector<8x128xf32>
    %26 = arith.subf %23, %25 : vector<8x128xf32>
    %27 = vector.broadcast %9 : f32 to vector<8x128xf32>
    %28 = arith.mulf %26, %27 : vector<8x128xf32>
    %29 = arith.truncf %28 : vector<8x128xf32> to vector<8x128xbf16>
    %cst_10 = arith.constant dense<0.000000e+00> : vector<8x128xf32>
    %30 = tpu.matmul %29, %0, %cst_10 {dimension_numbers = #tpu.dot_dimension_numbers<[1], [0], [0], [1], [0, 0, 1, 1], [], []>} : vector<8x128xbf16>, vector<128x128xbf16>, vector<8x128xf32> -> vector<8x128xf32>
    %31 = arith.addf %30, %3 : vector<8x128xf32>
    %32 = arith.subf %15, %20 : vector<8x128xf32>
    %33 = vector.broadcast %8 : f32 to vector<8x128xf32>
    %34 = arith.mulf %33, %32 : vector<8x128xf32>
    %35 = arith.addf %15, %34 : vector<8x128xf32>
    %36 = arith.subf %26, %31 : vector<8x128xf32>
    %37 = vector.broadcast %10 : f32 to vector<8x128xf32>
    %38 = arith.mulf %37, %36 : vector<8x128xf32>
    %39 = arith.addf %35, %38 : vector<8x128xf32>
    %c6 = arith.constant 6 : index
    %40 = memref.load %arg1[%c6] : memref<30xf32, #tpu.memory_space<smem>>
    %c7 = arith.constant 7 : index
    %41 = memref.load %arg1[%c7] : memref<30xf32, #tpu.memory_space<smem>>
    %c8 = arith.constant 8 : index
    %42 = memref.load %arg1[%c8] : memref<30xf32, #tpu.memory_space<smem>>
    %c9 = arith.constant 9 : index
    %43 = memref.load %arg1[%c9] : memref<30xf32, #tpu.memory_space<smem>>
    %c10 = arith.constant 10 : index
    %44 = memref.load %arg1[%c10] : memref<30xf32, #tpu.memory_space<smem>>
    %c11 = arith.constant 11 : index
    %45 = memref.load %arg1[%c11] : memref<30xf32, #tpu.memory_space<smem>>
    %c1_11 = arith.constant 1 : index
    %c0_12 = arith.constant 0 : index
    %c0_13 = arith.constant 0 : index
    %46 = vector.load %arg3[%c1_11, %c0_12, %c0_13] : memref<5x8x128xf32, #tpu.memory_space<vmem>>, vector<1x8x128xf32>
    %47 = vector.shape_cast %46 : vector<1x8x128xf32> to vector<8x128xf32>
    %48 = vector.broadcast %40 : f32 to vector<8x128xf32>
    %49 = arith.mulf %48, %47 : vector<8x128xf32>
    %50 = arith.addf %39, %49 : vector<8x128xf32>
    %51 = vector.broadcast %41 : f32 to vector<8x128xf32>
    %52 = arith.mulf %50, %51 : vector<8x128xf32>
    %53 = arith.truncf %52 : vector<8x128xf32> to vector<8x128xbf16>
    %cst_14 = arith.constant dense<0.000000e+00> : vector<8x128xf32>
    %54 = tpu.matmul %53, %0, %cst_14 {dimension_numbers = #tpu.dot_dimension_numbers<[1], [0], [0], [1], [0, 0, 1, 1], [], []>} : vector<8x128xbf16>, vector<128x128xbf16>, vector<8x128xf32> -> vector<8x128xf32>
    %55 = arith.addf %54, %3 : vector<8x128xf32>
    %cst_15 = arith.constant 1.000000e+00 : f32
    %56 = arith.addf %cst_15, %42 : f32
    %57 = vector.broadcast %56 : f32 to vector<8x128xf32>
    %58 = arith.mulf %57, %50 : vector<8x128xf32>
    %59 = vector.broadcast %42 : f32 to vector<8x128xf32>
    %60 = arith.mulf %59, %55 : vector<8x128xf32>
    %61 = arith.subf %58, %60 : vector<8x128xf32>
    %62 = vector.broadcast %44 : f32 to vector<8x128xf32>
    %63 = arith.mulf %61, %62 : vector<8x128xf32>
    %64 = arith.truncf %63 : vector<8x128xf32> to vector<8x128xbf16>
    %cst_16 = arith.constant dense<0.000000e+00> : vector<8x128xf32>
    %65 = tpu.matmul %64, %0, %cst_16 {dimension_numbers = #tpu.dot_dimension_numbers<[1], [0], [0], [1], [0, 0, 1, 1], [], []>} : vector<8x128xbf16>, vector<128x128xbf16>, vector<8x128xf32> -> vector<8x128xf32>
    %66 = arith.addf %65, %3 : vector<8x128xf32>
    %67 = arith.subf %50, %55 : vector<8x128xf32>
    %68 = vector.broadcast %43 : f32 to vector<8x128xf32>
    %69 = arith.mulf %68, %67 : vector<8x128xf32>
    %70 = arith.addf %50, %69 : vector<8x128xf32>
    %71 = arith.subf %61, %66 : vector<8x128xf32>
    %72 = vector.broadcast %45 : f32 to vector<8x128xf32>
    %73 = arith.mulf %72, %71 : vector<8x128xf32>
    %74 = arith.addf %70, %73 : vector<8x128xf32>
    %c12 = arith.constant 12 : index
    %75 = memref.load %arg1[%c12] : memref<30xf32, #tpu.memory_space<smem>>
    %c13 = arith.constant 13 : index
    %76 = memref.load %arg1[%c13] : memref<30xf32, #tpu.memory_space<smem>>
    %c14 = arith.constant 14 : index
    %77 = memref.load %arg1[%c14] : memref<30xf32, #tpu.memory_space<smem>>
    %c15 = arith.constant 15 : index
    %78 = memref.load %arg1[%c15] : memref<30xf32, #tpu.memory_space<smem>>
    %c16 = arith.constant 16 : index
    %79 = memref.load %arg1[%c16] : memref<30xf32, #tpu.memory_space<smem>>
    %c17 = arith.constant 17 : index
    %80 = memref.load %arg1[%c17] : memref<30xf32, #tpu.memory_space<smem>>
    %c2_17 = arith.constant 2 : index
    %c0_18 = arith.constant 0 : index
    %c0_19 = arith.constant 0 : index
    %81 = vector.load %arg3[%c2_17, %c0_18, %c0_19] : memref<5x8x128xf32, #tpu.memory_space<vmem>>, vector<1x8x128xf32>
    %82 = vector.shape_cast %81 : vector<1x8x128xf32> to vector<8x128xf32>
    %83 = vector.broadcast %75 : f32 to vector<8x128xf32>
    %84 = arith.mulf %83, %82 : vector<8x128xf32>
    %85 = arith.addf %74, %84 : vector<8x128xf32>
    %86 = vector.broadcast %76 : f32 to vector<8x128xf32>
    %87 = arith.mulf %85, %86 : vector<8x128xf32>
    %88 = arith.truncf %87 : vector<8x128xf32> to vector<8x128xbf16>
    %cst_20 = arith.constant dense<0.000000e+00> : vector<8x128xf32>
    %89 = tpu.matmul %88, %0, %cst_20 {dimension_numbers = #tpu.dot_dimension_numbers<[1], [0], [0], [1], [0, 0, 1, 1], [], []>} : vector<8x128xbf16>, vector<128x128xbf16>, vector<8x128xf32> -> vector<8x128xf32>
    %90 = arith.addf %89, %3 : vector<8x128xf32>
    %cst_21 = arith.constant 1.000000e+00 : f32
    %91 = arith.addf %cst_21, %77 : f32
    %92 = vector.broadcast %91 : f32 to vector<8x128xf32>
    %93 = arith.mulf %92, %85 : vector<8x128xf32>
    %94 = vector.broadcast %77 : f32 to vector<8x128xf32>
    %95 = arith.mulf %94, %90 : vector<8x128xf32>
    %96 = arith.subf %93, %95 : vector<8x128xf32>
    %97 = vector.broadcast %79 : f32 to vector<8x128xf32>
    %98 = arith.mulf %96, %97 : vector<8x128xf32>
    %99 = arith.truncf %98 : vector<8x128xf32> to vector<8x128xbf16>
    %cst_22 = arith.constant dense<0.000000e+00> : vector<8x128xf32>
    %100 = tpu.matmul %99, %0, %cst_22 {dimension_numbers = #tpu.dot_dimension_numbers<[1], [0], [0], [1], [0, 0, 1, 1], [], []>} : vector<8x128xbf16>, vector<128x128xbf16>, vector<8x128xf32> -> vector<8x128xf32>
    %101 = arith.addf %100, %3 : vector<8x128xf32>
    %102 = arith.subf %85, %90 : vector<8x128xf32>
    %103 = vector.broadcast %78 : f32 to vector<8x128xf32>
    %104 = arith.mulf %103, %102 : vector<8x128xf32>
    %105 = arith.addf %85, %104 : vector<8x128xf32>
    %106 = arith.subf %96, %101 : vector<8x128xf32>
    %107 = vector.broadcast %80 : f32 to vector<8x128xf32>
    %108 = arith.mulf %107, %106 : vector<8x128xf32>
    %109 = arith.addf %105, %108 : vector<8x128xf32>
    %c18 = arith.constant 18 : index
    %110 = memref.load %arg1[%c18] : memref<30xf32, #tpu.memory_space<smem>>
    %c19 = arith.constant 19 : index
    %111 = memref.load %arg1[%c19] : memref<30xf32, #tpu.memory_space<smem>>
    %c20 = arith.constant 20 : index
    %112 = memref.load %arg1[%c20] : memref<30xf32, #tpu.memory_space<smem>>
    %c21 = arith.constant 21 : index
    %113 = memref.load %arg1[%c21] : memref<30xf32, #tpu.memory_space<smem>>
    %c22 = arith.constant 22 : index
    %114 = memref.load %arg1[%c22] : memref<30xf32, #tpu.memory_space<smem>>
    %c23 = arith.constant 23 : index
    %115 = memref.load %arg1[%c23] : memref<30xf32, #tpu.memory_space<smem>>
    %c3_23 = arith.constant 3 : index
    %c0_24 = arith.constant 0 : index
    %c0_25 = arith.constant 0 : index
    %116 = vector.load %arg3[%c3_23, %c0_24, %c0_25] : memref<5x8x128xf32, #tpu.memory_space<vmem>>, vector<1x8x128xf32>
    %117 = vector.shape_cast %116 : vector<1x8x128xf32> to vector<8x128xf32>
    %118 = vector.broadcast %110 : f32 to vector<8x128xf32>
    %119 = arith.mulf %118, %117 : vector<8x128xf32>
    %120 = arith.addf %109, %119 : vector<8x128xf32>
    %121 = vector.broadcast %111 : f32 to vector<8x128xf32>
    %122 = arith.mulf %120, %121 : vector<8x128xf32>
    %123 = arith.truncf %122 : vector<8x128xf32> to vector<8x128xbf16>
    %cst_26 = arith.constant dense<0.000000e+00> : vector<8x128xf32>
    %124 = tpu.matmul %123, %0, %cst_26 {dimension_numbers = #tpu.dot_dimension_numbers<[1], [0], [0], [1], [0, 0, 1, 1], [], []>} : vector<8x128xbf16>, vector<128x128xbf16>, vector<8x128xf32> -> vector<8x128xf32>
    %125 = arith.addf %124, %3 : vector<8x128xf32>
    %cst_27 = arith.constant 1.000000e+00 : f32
    %126 = arith.addf %cst_27, %112 : f32
    %127 = vector.broadcast %126 : f32 to vector<8x128xf32>
    %128 = arith.mulf %127, %120 : vector<8x128xf32>
    %129 = vector.broadcast %112 : f32 to vector<8x128xf32>
    %130 = arith.mulf %129, %125 : vector<8x128xf32>
    %131 = arith.subf %128, %130 : vector<8x128xf32>
    %132 = vector.broadcast %114 : f32 to vector<8x128xf32>
    %133 = arith.mulf %131, %132 : vector<8x128xf32>
    %134 = arith.truncf %133 : vector<8x128xf32> to vector<8x128xbf16>
    %cst_28 = arith.constant dense<0.000000e+00> : vector<8x128xf32>
    %135 = tpu.matmul %134, %0, %cst_28 {dimension_numbers = #tpu.dot_dimension_numbers<[1], [0], [0], [1], [0, 0, 1, 1], [], []>} : vector<8x128xbf16>, vector<128x128xbf16>, vector<8x128xf32> -> vector<8x128xf32>
    %136 = arith.addf %135, %3 : vector<8x128xf32>
    %137 = arith.subf %120, %125 : vector<8x128xf32>
    %138 = vector.broadcast %113 : f32 to vector<8x128xf32>
    %139 = arith.mulf %138, %137 : vector<8x128xf32>
    %140 = arith.addf %120, %139 : vector<8x128xf32>
    %141 = arith.subf %131, %136 : vector<8x128xf32>
    %142 = vector.broadcast %115 : f32 to vector<8x128xf32>
    %143 = arith.mulf %142, %141 : vector<8x128xf32>
    %144 = arith.addf %140, %143 : vector<8x128xf32>
    %c24 = arith.constant 24 : index
    %145 = memref.load %arg1[%c24] : memref<30xf32, #tpu.memory_space<smem>>
    %c25 = arith.constant 25 : index
    %146 = memref.load %arg1[%c25] : memref<30xf32, #tpu.memory_space<smem>>
    %c26 = arith.constant 26 : index
    %147 = memref.load %arg1[%c26] : memref<30xf32, #tpu.memory_space<smem>>
    %c4_29 = arith.constant 4 : index
    %c0_30 = arith.constant 0 : index
    %c0_31 = arith.constant 0 : index
    %148 = vector.load %arg3[%c4_29, %c0_30, %c0_31] : memref<5x8x128xf32, #tpu.memory_space<vmem>>, vector<1x8x128xf32>
    %149 = vector.shape_cast %148 : vector<1x8x128xf32> to vector<8x128xf32>
    %150 = vector.broadcast %145 : f32 to vector<8x128xf32>
    %151 = arith.mulf %150, %149 : vector<8x128xf32>
    %152 = arith.addf %144, %151 : vector<8x128xf32>
    %153 = vector.broadcast %146 : f32 to vector<8x128xf32>
    %154 = arith.mulf %152, %153 : vector<8x128xf32>
    %155 = arith.truncf %154 : vector<8x128xf32> to vector<8x128xbf16>
    %cst_32 = arith.constant dense<0.000000e+00> : vector<8x128xf32>
    %156 = tpu.matmul %155, %0, %cst_32 {dimension_numbers = #tpu.dot_dimension_numbers<[1], [0], [0], [1], [0, 0, 1, 1], [], []>} : vector<8x128xbf16>, vector<128x128xbf16>, vector<8x128xf32> -> vector<8x128xf32>
    %157 = arith.addf %156, %3 : vector<8x128xf32>
    %cst_33 = arith.constant 1.000000e+00 : f32
    %158 = arith.addf %cst_33, %147 : f32
    %159 = vector.broadcast %158 : f32 to vector<8x128xf32>
    %160 = arith.mulf %159, %152 : vector<8x128xf32>
    %161 = vector.broadcast %147 : f32 to vector<8x128xf32>
    %162 = arith.mulf %161, %157 : vector<8x128xf32>
    %163 = arith.subf %160, %162 : vector<8x128xf32>
    %c0_34 = arith.constant 0 : index
    %c0_35 = arith.constant 0 : index
    %164 = vector.load %arg6[%c0_34, %c0_35] : memref<8x128xf32, #tpu.memory_space<vmem>>, vector<8x128xf32>
    tpu.vector_store %arg6[%c0_34, %c0_35], %163 {strides = array<i32>} : memref<8x128xf32, #tpu.memory_space<vmem>>, vector<8x128xf32>,
    return
  }
  func.func @transform_0(%arg0: i32, %arg1: memref<30xf32, #tpu.memory_space<smem>>) -> (i32, i32) {
    %c0_i32 = arith.constant 0 : i32
    %c0_i32_0 = arith.constant 0 : i32
    %c0_i32_1 = arith.constant 0 : i32
    return %c0_i32, %c0_i32_0 : i32, i32
  }
  func.func @transform_1(%arg0: i32, %arg1: memref<30xf32, #tpu.memory_space<smem>>) -> (i32, i32, i32) {
    %c0_i32 = arith.constant 0 : i32
    %c0_i32_0 = arith.constant 0 : i32
    %c0_i32_1 = arith.constant 0 : i32
    %c0_i32_2 = arith.constant 0 : i32
    return %c0_i32, %c0_i32_0, %c0_i32_1 : i32, i32, i32
  }
  func.func @transform_2(%arg0: i32, %arg1: memref<30xf32, #tpu.memory_space<smem>>) -> (i32, i32) {
    %c0_i32 = arith.constant 0 : i32
    %c0_i32_0 = arith.constant 0 : i32
    %c0_i32_1 = arith.constant 0 : i32
    return %c0_i32, %c0_i32_0 : i32, i32
  }
  func.func @transform_3(%arg0: i32, %arg1: memref<30xf32, #tpu.memory_space<smem>>) -> (i32, i32) {
    %c0_i32 = arith.constant 0 : i32
    %c0_i32_0 = arith.constant 0 : i32
    %c0_i32_1 = arith.constant 0 : i32
    return %c0_i32, %c0_i32_0 : i32, i32
  }
  func.func @transform_4(%arg0: i32, %arg1: memref<30xf32, #tpu.memory_space<smem>>) -> (i32, i32) {
    %c0_i32 = arith.constant 0 : i32
    %c0_i32_0 = arith.constant 0 : i32
    %c0_i32_1 = arith.constant 0 : i32
    return %c0_i32, %c0_i32_0 : i32, i32
  }
}

</mosaic_0001>

<llo_original>
// kernel: tpu_custom_call.1
$region0: #{tpu_custom_call.1}
  #allocation0 [shape = 'u32[]', space=smem, size = 0x4, offset = 0x4, fixed_abs, tag = 'smem constant byte address 0x4 - core index']
  #allocation1 [shape = 'u32[144,128]{1,0:T(1,128)}', space=vmem, size = 0x12000, scoped, tag = 'internal scratch']
  #allocation2 [shape = 's32[1]{0}', space=sflag, size = 0x4, scoped, tag = 'scoped memory for tpu_custom_call.1']
  #allocation3 [shape = 'u8[512]{0}', space=smem, size = 0x200, scoped, tag = 'prefetched SMEM operand 0']
  %s0 = inlined_call_operand.hbm [shape: f32[30], index: 0, kind: input, shape index: {}]
  %s1 = inlined_call_operand.hbm [shape: f32[8,128], index: 1, kind: input, shape index: {}]
  %s2 = inlined_call_operand.hbm [shape: f32[5,8,128], index: 2, kind: input, shape index: {}]
  %s3 = inlined_call_operand.hbm [shape: bf16[128,128], index: 3, kind: input, shape index: {}]
  %s4 = inlined_call_operand.vmem [shape: f32[1,128], index: 4, kind: input, shape index: {}]
  %s5 = inlined_call_operand.hbm [shape: f32[8,128], index: 5, kind: output, shape index: {}]
  %s6 = sld [smem:[#allocation0]]
  $region38: #{tpu_custom_call.1} parent=0
    _
  %s8 = ssub.s32 1, %s6
  %s9 = scalar_select 0, %s8, %s6
  %11 = dma.hbm_to_smem %s0, 16, [#allocation3], [#allocation2]
  %12 = dma.done [#allocation2], 16
  %13 = sfence
  $region1: #{tpu_custom_call.1} parent=0
    #allocation4 [shape = 'u8[4096]{0}', space=vmem, size = 0x1000, scoped, tag = 'input window, operand 1, single buffered']
    #allocation5 [shape = 's32[1]{0}', space=sflag, size = 0x4, scoped, tag = 'scoped memory for tpu_custom_call.1']
    #allocation6 [shape = 's32[1]{0}', space=sflag, size = 0x4, scoped, tag = 'scoped memory for tpu_custom_call.1']
    #allocation7 [shape = 'u8[20480]{0}', space=vmem, size = 0x5000, scoped, tag = 'input window, operand 2, single buffered']
    #allocation8 [shape = 's32[1]{0}', space=sflag, size = 0x4, scoped, tag = 'scoped memory for tpu_custom_call.1']
    #allocation9 [shape = 'u8[32768]{0}', space=vmem, size = 0x8000, scoped, tag = 'input window, operand 3, single buffered']
    #allocation10 [shape = 'u8[4096]{0}', space=vmem, size = 0x1000, scoped, tag = 'output window, operand 0, single buffered']
    %14 = vsyncpa [#allocation5], 0
    %15 = vsyncpa [#allocation8], 0
    %16 = vsyncpa [#allocation6], 0
    // Predicated region
    $region2: #{tpu_custom_call.1} parent=1 // pred_check
      _
    $region3: #{tpu_custom_call.1} parent=1 // pred_check_branch
      %18 = sbr.rel (0) target = $region5
    $region4: #{tpu_custom_call.1} parent=1 // pred_region
      %s20 = ssub.s32 128, 128
      %21 = vsyncadd [#allocation5], %s20
      %s23 = sshll.u32 [#allocation4], 4
      %s24 = int_to_ptr.vmem [resolvable:$true] %s23
      %26 = dma.hbm_to_vmem [thread:$0]  %s1, 128, %s24, [#allocation5]
    $region5: #{tpu_custom_call.1} parent=1 // pred_fallthru
      _
    // Predicated region
    $region6: #{tpu_custom_call.1} parent=1 // pred_check
      _
    $region7: #{tpu_custom_call.1} parent=1 // pred_check_branch
      %28 = sbr.rel (0) target = $region9
    $region8: #{tpu_custom_call.1} parent=1 // pred_region
      %s30 = ssub.s32 640, 640
      %31 = vsyncadd [#allocation8], %s30
      %s32 = sshll.u32 [#allocation7], 4
      %s33 = int_to_ptr.vmem [resolvable:$true] %s32
      %38 = dma.hbm_to_vmem [thread:$0]  %s2, 640, %s33, [#allocation8], 128, 128, 8
    $region9: #{tpu_custom_call.1} parent=1 // pred_fallthru
      _
    // Predicated region
    $region10: #{tpu_custom_call.1} parent=1 // pred_check
      _
    $region11: #{tpu_custom_call.1} parent=1 // pred_check_branch
      %40 = sbr.rel (0) target = $region13
    $region12: #{tpu_custom_call.1} parent=1 // pred_region
      %s42 = ssub.s32 1024, 1024
      %43 = vsyncadd [#allocation8], %s42
      %s44 = sshll.u32 [#allocation9], 4
      %s45 = int_to_ptr.vmem [resolvable:$true] %s44
      %50 = dma.hbm_to_vmem [thread:$0]  %s3, 1024, %s45, [#allocation8], 64, 64, 4
    $region13: #{tpu_custom_call.1} parent=1 // pred_fallthru
      _
    // Predicated region
    $region14: #{tpu_custom_call.1} parent=1 // pred_check
      _
    $region15: #{tpu_custom_call.1} parent=1 // pred_check_branch
      %52 = sbr.rel (0) target = $region17
    $region16: #{tpu_custom_call.1} parent=1 // pred_region
      _
    $region17: #{tpu_custom_call.1} parent=1 // pred_fallthru
      _
    // Predicated region
    $region18: #{tpu_custom_call.1} parent=1 // pred_check
      _
    $region19: #{tpu_custom_call.1} parent=1 // pred_check_branch
      %54 = sbr.rel (0) target = $region21
    $region20: #{tpu_custom_call.1} parent=1 // pred_region
      %55 = dma.done [#allocation5], 128
    $region21: #{tpu_custom_call.1} parent=1 // pred_fallthru
      _
    // Predicated region
    $region22: #{tpu_custom_call.1} parent=1 // pred_check
      _
    $region23: #{tpu_custom_call.1} parent=1 // pred_check_branch
      %57 = sbr.rel (0) target = $region25
    $region24: #{tpu_custom_call.1} parent=1 // pred_region
      %58 = dma.done [#allocation8], 640
    $region25: #{tpu_custom_call.1} parent=1 // pred_fallthru
      _
    // Predicated region
    $region26: #{tpu_custom_call.1} parent=1 // pred_check
      _
    $region27: #{tpu_custom_call.1} parent=1 // pred_check_branch
      %60 = sbr.rel (0) target = $region29
    $region28: #{tpu_custom_call.1} parent=1 // pred_region
      %61 = dma.done [#allocation8], 1024
    $region29: #{tpu_custom_call.1} parent=1 // pred_fallthru
      _
    %v63 = vld [vmem:[#allocation9] sm:$0xf]
    %v64 = vld [vmem:[#allocation9 + $0x4] sm:$0xf]
    %v65 = vld [vmem:[#allocation9 + $0x8] sm:$0xf]
    %v66 = vld [vmem:[#allocation9 + $0xc] sm:$0xf]
    %v67 = vld [vmem:[#allocation9 + $0x10] sm:$0xf]
    %v68 = vld [vmem:[#allocation9 + $0x14] sm:$0xf]
    %v69 = vld [vmem:[#allocation9 + $0x18] sm:$0xf]
    %v70 = vld [vmem:[#allocation9 + $0x1c] sm:$0xf]
    %v71 = vld [vmem:[#allocation9 + $0x20] sm:$0xf]
    %v72 = vld [vmem:[#allocation9 + $0x24] sm:$0xf]
    %v73 = vld [vmem:[#allocation9 + $0x28] sm:$0xf]
    %v74 = vld [vmem:[#allocation9 + $0x2c] sm:$0xf]
    %v75 = vld [vmem:[#allocation9 + $0x30] sm:$0xf]
    %v76 = vld [vmem:[#allocation9 + $0x34] sm:$0xf]
    %v77 = vld [vmem:[#allocation9 + $0x38] sm:$0xf]
    %v78 = vld [vmem:[#allocation9 + $0x3c] sm:$0xf]
    %v79 = vld [vmem:[%s4] sm:$0x1]
    %v81 = vlaneseq
    %v82 = vshrl.u32 %v81, 7
    %v83 = vsub.s32 0, %v82
    %v84 = vrot.slane %v79, %v83
    %v86 = vld [vmem:[#allocation4] sm:$0xff]
    %s87 = sld [smem:[#allocation3]]
    %s88 = sld [smem:[#allocation3 + $0x1]]
    %s89 = sld [smem:[#allocation3 + $0x2]]
    %s90 = sld [smem:[#allocation3 + $0x3]]
    %s91 = sld [smem:[#allocation3 + $0x4]]
    %s92 = sld [smem:[#allocation3 + $0x5]]
    %v93 = vld [vmem:[#allocation7] sm:$0xff]
    %v94 = vstv %s87
    %v95 = vmul.f32 %v94, %v93
    %v96 = vadd.f32 %v86, %v95
    %v97 = vstv %s88
    %v98 = vmul.f32 %v96, %v97
    %v99 = vpack.c.bf16 %v98, %v98
    %v116 = vunpack.c.l.b16 %v63
    %v117 = vunpack.c.l.b16 %v64
    %v118 = vunpack.c.l.b16 %v65
    %v119 = vunpack.c.l.b16 %v66
    %v120 = vunpack.c.l.b16 %v67
    %v121 = vunpack.c.l.b16 %v68
    %v122 = vunpack.c.l.b16 %v69
    %v123 = vunpack.c.l.b16 %v70
    %v124 = vunpack.c.l.b16 %v71
    %v125 = vunpack.c.l.b16 %v72
    %v126 = vunpack.c.l.b16 %v73
    %v127 = vunpack.c.l.b16 %v74
    %v128 = vunpack.c.l.b16 %v75
    %v129 = vunpack.c.l.b16 %v76
    %v130 = vunpack.c.l.b16 %v77
    %v131 = vunpack.c.l.b16 %v78
    %v132 = vpack.c.b16 %v117, %v116
    %v133 = vpack.c.b16 %v119, %v118
    %v134 = vpack.c.b16 %v121, %v120
    %v135 = vpack.c.b16 %v123, %v122
    %v136 = vpack.c.b16 %v125, %v124
    %v137 = vpack.c.b16 %v127, %v126
    %v138 = vpack.c.b16 %v129, %v128
    %v139 = vpack.c.b16 %v131, %v130
    %148 = vmatprep.subr.bf16.mxu0 0
    %149 = vmatpush1.bf16.msra.mxu0 %v139
    %150 = vmatprep.subr.bf16.mxu0 0
    %151 = vmatpush1.bf16.msra.mxu0 %v138
    %152 = vmatprep.subr.bf16.mxu0 0
    %153 = vmatpush1.bf16.msra.mxu0 %v137
    %154 = vmatprep.subr.bf16.mxu0 0
    %155 = vmatpush1.bf16.msra.mxu0 %v136
    %156 = vmatprep.subr.bf16.mxu0 0
    %157 = vmatpush1.bf16.msra.mxu0 %v135
    %158 = vmatprep.subr.bf16.mxu0 0
    %159 = vmatpush1.bf16.msra.mxu0 %v134
    %160 = vmatprep.subr.bf16.mxu0 0
    %161 = vmatpush1.bf16.msra.mxu0 %v133
    %162 = vmatprep.subr.bf16.mxu0 0
    %163 = vmatpush1.bf16.msra.mxu0 %v132
    %164 = vmatprep.subr.bf16.mxu0 0
    %165 = vmatpush2.bf16.msra.mxu0 0
    %166 = vmatprep.subr.bf16.mxu0 0
    %167 = vmatpush2.bf16.msra.mxu0 0
    %168 = vmatprep.subr.bf16.mxu0 0
    %169 = vmatpush2.bf16.msra.mxu0 0
    %170 = vmatprep.subr.bf16.mxu0 0
    %171 = vmatpush2.bf16.msra.mxu0 0
    %172 = vmatprep.subr.bf16.mxu0 0
    %173 = vmatpush2.bf16.msra.mxu0 0
    %174 = vmatprep.subr.bf16.mxu0 0
    %175 = vmatpush2.bf16.msra.mxu0 0
    %176 = vmatprep.subr.bf16.mxu0 0
    %177 = vmatpush2.bf16.msra.mxu0 0
    %178 = vmatprep.subr.bf16.mxu0 0
    %179 = vmatpush2.bf16.msra.mxu0 0
    %180 = vmatprep.mubr.bf16.mxu0 0
    %181 = vmatmul.mubr.bf16.gmra.mxu0 %v99
    %v182 = vpop.f32.mrf.mxu0
    %v183 = vadd.f32 %v84, %v182
    %v184 = vpop.f32.mrf.mxu0
    %v185 = vpop.f32.mrf.mxu0
    %v186 = vpop.f32.mrf.mxu0
    %187 = vdwg.mxu0
    %s188 = sadd.f32 %s89, 1.0
    %v189 = vstv %s188
    %v190 = vmul.f32 %v189, %v96
    %v191 = vstv %s89
    %v192 = vmul.f32 %v191, %v183
    %v193 = vsub.f32 %v190, %v192
    %v194 = vstv %s91
    %v195 = vmul.f32 %v193, %v194
    %v196 = vpack.c.bf16 %v195, %v195
    %197 = vmatprep.subr.bf16.mxu0 0
    %198 = vmatpush1.bf16.msra.mxu0 %v139
    %199 = vmatprep.subr.bf16.mxu0 0
    %200 = vmatpush1.bf16.msra.mxu0 %v138
    %201 = vmatprep.subr.bf16.mxu0 0
    %202 = vmatpush1.bf16.msra.mxu0 %v137
    %203 = vmatprep.subr.bf16.mxu0 0
    %204 = vmatpush1.bf16.msra.mxu0 %v136
    %205 = vmatprep.subr.bf16.mxu0 0
    %206 = vmatpush1.bf16.msra.mxu0 %v135
    %207 = vmatprep.subr.bf16.mxu0 0
    %208 = vmatpush1.bf16.msra.mxu0 %v134
    %209 = vmatprep.subr.bf16.mxu0 0
    %210 = vmatpush1.bf16.msra.mxu0 %v133
    %211 = vmatprep.subr.bf16.mxu0 0
    %212 = vmatpush1.bf16.msra.mxu0 %v132
    %213 = vmatprep.subr.bf16.mxu0 0
    %214 = vmatpush2.bf16.msra.mxu0 0
    %215 = vmatprep.subr.bf16.mxu0 0
    %216 = vmatpush2.bf16.msra.mxu0 0
    %217 = vmatprep.subr.bf16.mxu0 0
    %218 = vmatpush2.bf16.msra.mxu0 0
    %219 = vmatprep.subr.bf16.mxu0 0
    %220 = vmatpush2.bf16.msra.mxu0 0
    %221 = vmatprep.subr.bf16.mxu0 0
    %222 = vmatpush2.bf16.msra.mxu0 0
    %223 = vmatprep.subr.bf16.mxu0 0
    %224 = vmatpush2.bf16.msra.mxu0 0
    %225 = vmatprep.subr.bf16.mxu0 0
    %226 = vmatpush2.bf16.msra.mxu0 0
    %227 = vmatprep.subr.bf16.mxu0 0
    %228 = vmatpush2.bf16.msra.mxu0 0
    %229 = vmatprep.mubr.bf16.mxu0 0
    %230 = vmatmul.mubr.bf16.gmra.mxu0 %v196
    %v231 = vpop.f32.mrf.mxu0
    %v232 = vadd.f32 %v84, %v231
    %v233 = vpop.f32.mrf.mxu0
    %v234 = vpop.f32.mrf.mxu0
    %v235 = vpop.f32.mrf.mxu0
    %236 = vdwg.mxu0
    %v237 = vsub.f32 %v96, %v183
    %v238 = vstv %s90
    %v239 = vmul.f32 %v238, %v237
    %v240 = vadd.f32 %v96, %v239
    %v241 = vsub.f32 %v193, %v232
    %v242 = vstv %s92
    %v243 = vmul.f32 %v242, %v241
    %v244 = vadd.f32 %v240, %v243
    %s245 = sld [smem:[#allocation3 + $0x6]]
    %s246 = sld [smem:[#allocation3 + $0x7]]
    %s247 = sld [smem:[#allocation3 + $0x8]]
    %s248 = sld [smem:[#allocation3 + $0x9]]
    %s249 = sld [smem:[#allocation3 + $0xa]]
    %s250 = sld [smem:[#allocation3 + $0xb]]
    %s251 = scalar_lea.vmem [#allocation7], 8
    %v252 = vld [vmem:[%s251] sm:$0xff]
    %v253 = vstv %s245
    %v254 = vmul.f32 %v253, %v252
    %v255 = vadd.f32 %v244, %v254
    %v256 = vstv %s246
    %v257 = vmul.f32 %v255, %v256
    %v258 = vpack.c.bf16 %v257, %v257
    %259 = vmatprep.subr.bf16.mxu0 0
    %260 = vmatpush1.bf16.msra.mxu0 %v139
    %261 = vmatprep.subr.bf16.mxu0 0
    %262 = vmatpush1.bf16.msra.mxu0 %v138
    %263 = vmatprep.subr.bf16.mxu0 0
    %264 = vmatpush1.bf16.msra.mxu0 %v137
    %265 = vmatprep.subr.bf16.mxu0 0
    %266 = vmatpush1.bf16.msra.mxu0 %v136
    %267 = vmatprep.subr.bf16.mxu0 0
    %268 = vmatpush1.bf16.msra.mxu0 %v135
    %269 = vmatprep.subr.bf16.mxu0 0
    %270 = vmatpush1.bf16.msra.mxu0 %v134
    %271 = vmatprep.subr.bf16.mxu0 0
    %272 = vmatpush1.bf16.msra.mxu0 %v133
    %273 = vmatprep.subr.bf16.mxu0 0
    %274 = vmatpush1.bf16.msra.mxu0 %v132
    %275 = vmatprep.subr.bf16.mxu0 0
    %276 = vmatpush2.bf16.msra.mxu0 0
    %277 = vmatprep.subr.bf16.mxu0 0
    %278 = vmatpush2.bf16.msra.mxu0 0
    %279 = vmatprep.subr.bf16.mxu0 0
    %280 = vmatpush2.bf16.msra.mxu0 0
    %281 = vmatprep.subr.bf16.mxu0 0
    %282 = vmatpush2.bf16.msra.mxu0 0
    %283 = vmatprep.subr.bf16.mxu0 0
    %284 = vmatpush2.bf16.msra.mxu0 0
    %285 = vmatprep.subr.bf16.mxu0 0
    %286 = vmatpush2.bf16.msra.mxu0 0
    %287 = vmatprep.subr.bf16.mxu0 0
    %288 = vmatpush2.bf16.msra.mxu0 0
    %289 = vmatprep.subr.bf16.mxu0 0
    %290 = vmatpush2.bf16.msra.mxu0 0
    %291 = vmatprep.mubr.bf16.mxu0 0
    %292 = vmatmul.mubr.bf16.gmra.mxu0 %v258
    %v293 = vpop.f32.mrf.mxu0
    %v294 = vadd.f32 %v84, %v293
    %v295 = vpop.f32.mrf.mxu0
    %v296 = vpop.f32.mrf.mxu0
    %v297 = vpop.f32.mrf.mxu0
    %298 = vdwg.mxu0
    %s299 = sadd.f32 %s247, 1.0
    %v300 = vstv %s299
    %v301 = vmul.f32 %v300, %v255
    %v302 = vstv %s247
    %v303 = vmul.f32 %v302, %v294
    %v304 = vsub.f32 %v301, %v303
    %v305 = vstv %s249
    %v306 = vmul.f32 %v304, %v305
    %v307 = vpack.c.bf16 %v306, %v306
    %308 = vmatprep.subr.bf16.mxu0 0
    %309 = vmatpush1.bf16.msra.mxu0 %v139
    %310 = vmatprep.subr.bf16.mxu0 0
    %311 = vmatpush1.bf16.msra.mxu0 %v138
    %312 = vmatprep.subr.bf16.mxu0 0
    %313 = vmatpush1.bf16.msra.mxu0 %v137
    %314 = vmatprep.subr.bf16.mxu0 0
    %315 = vmatpush1.bf16.msra.mxu0 %v136
    %316 = vmatprep.subr.bf16.mxu0 0
    %317 = vmatpush1.bf16.msra.mxu0 %v135
    %318 = vmatprep.subr.bf16.mxu0 0
    %319 = vmatpush1.bf16.msra.mxu0 %v134
    %320 = vmatprep.subr.bf16.mxu0 0
    %321 = vmatpush1.bf16.msra.mxu0 %v133
    %322 = vmatprep.subr.bf16.mxu0 0
    %323 = vmatpush1.bf16.msra.mxu0 %v132
    %324 = vmatprep.subr.bf16.mxu0 0
    %325 = vmatpush2.bf16.msra.mxu0 0
    %326 = vmatprep.subr.bf16.mxu0 0
    %327 = vmatpush2.bf16.msra.mxu0 0
    %328 = vmatprep.subr.bf16.mxu0 0
    %329 = vmatpush2.bf16.msra.mxu0 0
    %330 = vmatprep.subr.bf16.mxu0 0
    %331 = vmatpush2.bf16.msra.mxu0 0
    %332 = vmatprep.subr.bf16.mxu0 0
    %333 = vmatpush2.bf16.msra.mxu0 0
    %334 = vmatprep.subr.bf16.mxu0 0
    %335 = vmatpush2.bf16.msra.mxu0 0
    %336 = vmatprep.subr.bf16.mxu0 0
    %337 = vmatpush2.bf16.msra.mxu0 0
    %338 = vmatprep.subr.bf16.mxu0 0
    %339 = vmatpush2.bf16.msra.mxu0 0
    %340 = vmatprep.mubr.bf16.mxu0 0
    %341 = vmatmul.mubr.bf16.gmra.mxu0 %v307
    %v342 = vpop.f32.mrf.mxu0
    %v343 = vadd.f32 %v84, %v342
    %v344 = vpop.f32.mrf.mxu0
    %v345 = vpop.f32.mrf.mxu0
    %v346 = vpop.f32.mrf.mxu0
    %347 = vdwg.mxu0
    %v348 = vsub.f32 %v255, %v294
    %v349 = vstv %s248
    %v350 = vmul.f32 %v349, %v348
    %v351 = vadd.f32 %v255, %v350
    %v352 = vsub.f32 %v304, %v343
    %v353 = vstv %s250
    %v354 = vmul.f32 %v353, %v352
    %v355 = vadd.f32 %v351, %v354
    %s356 = sld [smem:[#allocation3 + $0xc]]
    %s357 = sld [smem:[#allocation3 + $0xd]]
    %s358 = sld [smem:[#allocation3 + $0xe]]
    %s359 = sld [smem:[#allocation3 + $0xf]]
    %s360 = sld [smem:[#allocation3 + $0x10]]
    %s361 = sld [smem:[#allocation3 + $0x11]]
    %s362 = scalar_lea.vmem [#allocation7], 16
    %v363 = vld [vmem:[%s362] sm:$0xff]
    %v364 = vstv %s356
    %v365 = vmul.f32 %v364, %v363
    %v366 = vadd.f32 %v355, %v365
    %v367 = vstv %s357
    %v368 = vmul.f32 %v366, %v367
    %v369 = vpack.c.bf16 %v368, %v368
    %370 = vmatprep.subr.bf16.mxu0 0
    %371 = vmatpush1.bf16.msra.mxu0 %v139
    %372 = vmatprep.subr.bf16.mxu0 0
    %373 = vmatpush1.bf16.msra.mxu0 %v138
    %374 = vmatprep.subr.bf16.mxu0 0
    %375 = vmatpush1.bf16.msra.mxu0 %v137
    %376 = vmatprep.subr.bf16.mxu0 0
    %377 = vmatpush1.bf16.msra.mxu0 %v136
    %378 = vmatprep.subr.bf16.mxu0 0
    %379 = vmatpush1.bf16.msra.mxu0 %v135
    %380 = vmatprep.subr.bf16.mxu0 0
    %381 = vmatpush1.bf16.msra.mxu0 %v134
    %382 = vmatprep.subr.bf16.mxu0 0
    %383 = vmatpush1.bf16.msra.mxu0 %v133
    %384 = vmatprep.subr.bf16.mxu0 0
    %385 = vmatpush1.bf16.msra.mxu0 %v132
    %386 = vmatprep.subr.bf16.mxu0 0
    %387 = vmatpush2.bf16.msra.mxu0 0
    %388 = vmatprep.subr.bf16.mxu0 0
    %389 = vmatpush2.bf16.msra.mxu0 0
    %390 = vmatprep.subr.bf16.mxu0 0
    %391 = vmatpush2.bf16.msra.mxu0 0
    %392 = vmatprep.subr.bf16.mxu0 0
    %393 = vmatpush2.bf16.msra.mxu0 0
    %394 = vmatprep.subr.bf16.mxu0 0
    %395 = vmatpush2.bf16.msra.mxu0 0
    %396 = vmatprep.subr.bf16.mxu0 0
    %397 = vmatpush2.bf16.msra.mxu0 0
    %398 = vmatprep.subr.bf16.mxu0 0
    %399 = vmatpush2.bf16.msra.mxu0 0
    %400 = vmatprep.subr.bf16.mxu0 0
    %401 = vmatpush2.bf16.msra.mxu0 0
    %402 = vmatprep.mubr.bf16.mxu0 0
    %403 = vmatmul.mubr.bf16.gmra.mxu0 %v369
    %v404 = vpop.f32.mrf.mxu0
    %v405 = vadd.f32 %v84, %v404
    %v406 = vpop.f32.mrf.mxu0
    %v407 = vpop.f32.mrf.mxu0
    %v408 = vpop.f32.mrf.mxu0
    %409 = vdwg.mxu0
    %s410 = sadd.f32 %s358, 1.0
    %v411 = vstv %s410
    %v412 = vmul.f32 %v411, %v366
    %v413 = vstv %s358
    %v414 = vmul.f32 %v413, %v405
    %v415 = vsub.f32 %v412, %v414
    %v416 = vstv %s360
    %v417 = vmul.f32 %v415, %v416
    %v418 = vpack.c.bf16 %v417, %v417
    %419 = vmatprep.subr.bf16.mxu0 0
    %420 = vmatpush1.bf16.msra.mxu0 %v139
    %421 = vmatprep.subr.bf16.mxu0 0
    %422 = vmatpush1.bf16.msra.mxu0 %v138
    %423 = vmatprep.subr.bf16.mxu0 0
    %424 = vmatpush1.bf16.msra.mxu0 %v137
    %425 = vmatprep.subr.bf16.mxu0 0
    %426 = vmatpush1.bf16.msra.mxu0 %v136
    %427 = vmatprep.subr.bf16.mxu0 0
    %428 = vmatpush1.bf16.msra.mxu0 %v135
    %429 = vmatprep.subr.bf16.mxu0 0
    %430 = vmatpush1.bf16.msra.mxu0 %v134
    %431 = vmatprep.subr.bf16.mxu0 0
    %432 = vmatpush1.bf16.msra.mxu0 %v133
    %433 = vmatprep.subr.bf16.mxu0 0
    %434 = vmatpush1.bf16.msra.mxu0 %v132
    %435 = vmatprep.subr.bf16.mxu0 0
    %436 = vmatpush2.bf16.msra.mxu0 0
    %437 = vmatprep.subr.bf16.mxu0 0
    %438 = vmatpush2.bf16.msra.mxu0 0
    %439 = vmatprep.subr.bf16.mxu0 0
    %440 = vmatpush2.bf16.msra.mxu0 0
    %441 = vmatprep.subr.bf16.mxu0 0
    %442 = vmatpush2.bf16.msra.mxu0 0
    %443 = vmatprep.subr.bf16.mxu0 0
    %444 = vmatpush2.bf16.msra.mxu0 0
    %445 = vmatprep.subr.bf16.mxu0 0
    %446 = vmatpush2.bf16.msra.mxu0 0
    %447 = vmatprep.subr.bf16.mxu0 0
    %448 = vmatpush2.bf16.msra.mxu0 0
    %449 = vmatprep.subr.bf16.mxu0 0
    %450 = vmatpush2.bf16.msra.mxu0 0
    %451 = vmatprep.mubr.bf16.mxu0 0
    %452 = vmatmul.mubr.bf16.gmra.mxu0 %v418
    %v453 = vpop.f32.mrf.mxu0
    %v454 = vadd.f32 %v84, %v453
    %v455 = vpop.f32.mrf.mxu0
    %v456 = vpop.f32.mrf.mxu0
    %v457 = vpop.f32.mrf.mxu0
    %458 = vdwg.mxu0
    %v459 = vsub.f32 %v366, %v405
    %v460 = vstv %s359
    %v461 = vmul.f32 %v460, %v459
    %v462 = vadd.f32 %v366, %v461
    %v463 = vsub.f32 %v415, %v454
    %v464 = vstv %s361
    %v465 = vmul.f32 %v464, %v463
    %v466 = vadd.f32 %v462, %v465
    %s467 = sld [smem:[#allocation3 + $0x12]]
    %s468 = sld [smem:[#allocation3 + $0x13]]
    %s469 = sld [smem:[#allocation3 + $0x14]]
    %s470 = sld [smem:[#allocation3 + $0x15]]
    %s471 = sld [smem:[#allocation3 + $0x16]]
    %s472 = sld [smem:[#allocation3 + $0x17]]
    %s473 = scalar_lea.vmem [#allocation7], 24
    %v474 = vld [vmem:[%s473] sm:$0xff]
    %v475 = vstv %s467
    %v476 = vmul.f32 %v475, %v474
    %v477 = vadd.f32 %v466, %v476
    %v478 = vstv %s468
    %v479 = vmul.f32 %v477, %v478
    %v480 = vpack.c.bf16 %v479, %v479
    %481 = vmatprep.subr.bf16.mxu0 0
    %482 = vmatpush1.bf16.msra.mxu0 %v139
    %483 = vmatprep.subr.bf16.mxu0 0
    %484 = vmatpush1.bf16.msra.mxu0 %v138
    %485 = vmatprep.subr.bf16.mxu0 0
    %486 = vmatpush1.bf16.msra.mxu0 %v137
    %487 = vmatprep.subr.bf16.mxu0 0
    %488 = vmatpush1.bf16.msra.mxu0 %v136
    %489 = vmatprep.subr.bf16.mxu0 0
    %490 = vmatpush1.bf16.msra.mxu0 %v135
    %491 = vmatprep.subr.bf16.mxu0 0
    %492 = vmatpush1.bf16.msra.mxu0 %v134
    %493 = vmatprep.subr.bf16.mxu0 0
    %494 = vmatpush1.bf16.msra.mxu0 %v133
    %495 = vmatprep.subr.bf16.mxu0 0
    %496 = vmatpush1.bf16.msra.mxu0 %v132
    %497 = vmatprep.subr.bf16.mxu0 0
    %498 = vmatpush2.bf16.msra.mxu0 0
    %499 = vmatprep.subr.bf16.mxu0 0
    %500 = vmatpush2.bf16.msra.mxu0 0
    %501 = vmatprep.subr.bf16.mxu0 0
    %502 = vmatpush2.bf16.msra.mxu0 0
    %503 = vmatprep.subr.bf16.mxu0 0
    %504 = vmatpush2.bf16.msra.mxu0 0
    %505 = vmatprep.subr.bf16.mxu0 0
    %506 = vmatpush2.bf16.msra.mxu0 0
    %507 = vmatprep.subr.bf16.mxu0 0
    %508 = vmatpush2.bf16.msra.mxu0 0
    %509 = vmatprep.subr.bf16.mxu0 0
    %510 = vmatpush2.bf16.msra.mxu0 0
    %511 = vmatprep.subr.bf16.mxu0 0
    %512 = vmatpush2.bf16.msra.mxu0 0
    %513 = vmatprep.mubr.bf16.mxu0 0
    %514 = vmatmul.mubr.bf16.gmra.mxu0 %v480
    %v515 = vpop.f32.mrf.mxu0
    %v516 = vadd.f32 %v84, %v515
    %v517 = vpop.f32.mrf.mxu0
    %v518 = vpop.f32.mrf.mxu0
    %v519 = vpop.f32.mrf.mxu0
    %520 = vdwg.mxu0
    %s521 = sadd.f32 %s469, 1.0
    %v522 = vstv %s521
    %v523 = vmul.f32 %v522, %v477
    %v524 = vstv %s469
    %v525 = vmul.f32 %v524, %v516
    %v526 = vsub.f32 %v523, %v525
    %v527 = vstv %s471
    %v528 = vmul.f32 %v526, %v527
    %v529 = vpack.c.bf16 %v528, %v528
    %530 = vmatprep.subr.bf16.mxu0 0
    %531 = vmatpush1.bf16.msra.mxu0 %v139
    %532 = vmatprep.subr.bf16.mxu0 0
    %533 = vmatpush1.bf16.msra.mxu0 %v138
    %534 = vmatprep.subr.bf16.mxu0 0
    %535 = vmatpush1.bf16.msra.mxu0 %v137
    %536 = vmatprep.subr.bf16.mxu0 0
    %537 = vmatpush1.bf16.msra.mxu0 %v136
    %538 = vmatprep.subr.bf16.mxu0 0
    %539 = vmatpush1.bf16.msra.mxu0 %v135
    %540 = vmatprep.subr.bf16.mxu0 0
    %541 = vmatpush1.bf16.msra.mxu0 %v134
    %542 = vmatprep.subr.bf16.mxu0 0
    %543 = vmatpush1.bf16.msra.mxu0 %v133
    %544 = vmatprep.subr.bf16.mxu0 0
    %545 = vmatpush1.bf16.msra.mxu0 %v132
    %546 = vmatprep.subr.bf16.mxu0 0
    %547 = vmatpush2.bf16.msra.mxu0 0
    %548 = vmatprep.subr.bf16.mxu0 0
    %549 = vmatpush2.bf16.msra.mxu0 0
    %550 = vmatprep.subr.bf16.mxu0 0
    %551 = vmatpush2.bf16.msra.mxu0 0
    %552 = vmatprep.subr.bf16.mxu0 0
    %553 = vmatpush2.bf16.msra.mxu0 0
    %554 = vmatprep.subr.bf16.mxu0 0
    %555 = vmatpush2.bf16.msra.mxu0 0
    %556 = vmatprep.subr.bf16.mxu0 0
    %557 = vmatpush2.bf16.msra.mxu0 0
    %558 = vmatprep.subr.bf16.mxu0 0
    %559 = vmatpush2.bf16.msra.mxu0 0
    %560 = vmatprep.subr.bf16.mxu0 0
    %561 = vmatpush2.bf16.msra.mxu0 0
    %562 = vmatprep.mubr.bf16.mxu0 0
    %563 = vmatmul.mubr.bf16.gmra.mxu0 %v529
    %v564 = vpop.f32.mrf.mxu0
    %v565 = vadd.f32 %v84, %v564
    %v566 = vpop.f32.mrf.mxu0
    %v567 = vpop.f32.mrf.mxu0
    %v568 = vpop.f32.mrf.mxu0
    %569 = vdwg.mxu0
    %v570 = vsub.f32 %v477, %v516
    %v571 = vstv %s470
    %v572 = vmul.f32 %v571, %v570
    %v573 = vadd.f32 %v477, %v572
    %v574 = vsub.f32 %v526, %v565
    %v575 = vstv %s472
    %v576 = vmul.f32 %v575, %v574
    %v577 = vadd.f32 %v573, %v576
    %s578 = sld [smem:[#allocation3 + $0x18]]
    %s579 = sld [smem:[#allocation3 + $0x19]]
    %s580 = sld [smem:[#allocation3 + $0x1a]]
    %s581 = scalar_lea.vmem [#allocation7], 32
    %v582 = vld [vmem:[%s581] sm:$0xff]
    %v583 = vstv %s578
    %v584 = vmul.f32 %v583, %v582
    %v585 = vadd.f32 %v577, %v584
    %v586 = vstv %s579
    %v587 = vmul.f32 %v585, %v586
    %v588 = vpack.c.bf16 %v587, %v587
    %589 = vmatprep.subr.bf16.mxu0 0
    %590 = vmatpush1.bf16.msra.mxu0 %v139
    %591 = vmatprep.subr.bf16.mxu0 0
    %592 = vmatpush1.bf16.msra.mxu0 %v138
    %593 = vmatprep.subr.bf16.mxu0 0
    %594 = vmatpush1.bf16.msra.mxu0 %v137
    %595 = vmatprep.subr.bf16.mxu0 0
    %596 = vmatpush1.bf16.msra.mxu0 %v136
    %597 = vmatprep.subr.bf16.mxu0 0
    %598 = vmatpush1.bf16.msra.mxu0 %v135
    %599 = vmatprep.subr.bf16.mxu0 0
    %600 = vmatpush1.bf16.msra.mxu0 %v134
    %601 = vmatprep.subr.bf16.mxu0 0
    %602 = vmatpush1.bf16.msra.mxu0 %v133
    %603 = vmatprep.subr.bf16.mxu0 0
    %604 = vmatpush1.bf16.msra.mxu0 %v132
    %605 = vmatprep.subr.bf16.mxu0 0
    %606 = vmatpush2.bf16.msra.mxu0 0
    %607 = vmatprep.subr.bf16.mxu0 0
    %608 = vmatpush2.bf16.msra.mxu0 0
    %609 = vmatprep.subr.bf16.mxu0 0
    %610 = vmatpush2.bf16.msra.mxu0 0
    %611 = vmatprep.subr.bf16.mxu0 0
    %612 = vmatpush2.bf16.msra.mxu0 0
    %613 = vmatprep.subr.bf16.mxu0 0
    %614 = vmatpush2.bf16.msra.mxu0 0
    %615 = vmatprep.subr.bf16.mxu0 0
    %616 = vmatpush2.bf16.msra.mxu0 0
    %617 = vmatprep.subr.bf16.mxu0 0
    %618 = vmatpush2.bf16.msra.mxu0 0
    %619 = vmatprep.subr.bf16.mxu0 0
    %620 = vmatpush2.bf16.msra.mxu0 0
    %621 = vmatprep.mubr.bf16.mxu0 0
    %622 = vmatmul.mubr.bf16.gmra.mxu0 %v588
    %v623 = vpop.f32.mrf.mxu0
    %v624 = vadd.f32 %v84, %v623
    %v625 = vpop.f32.mrf.mxu0
    %v626 = vpop.f32.mrf.mxu0
    %v627 = vpop.f32.mrf.mxu0
    %628 = vdwg.mxu0
    %s629 = sadd.f32 %s580, 1.0
    %v630 = vstv %s629
    %v631 = vmul.f32 %v630, %v585
    %v632 = vstv %s580
    %v633 = vmul.f32 %v632, %v624
    %v634 = vsub.f32 %v631, %v633
    %635 = vst [vmem:[#allocation10] sm:$0xff] %v634
    // Predicated region
    $region30: #{tpu_custom_call.1} parent=1 // pred_check
      _
    $region31: #{tpu_custom_call.1} parent=1 // pred_check_branch
      %637 = sbr.rel (0) target = $region33
    $region32: #{tpu_custom_call.1} parent=1 // pred_region
      %s639 = ssub.s32 128, 128
      %640 = vsyncadd [#allocation6], %s639
      %s642 = sshll.u32 [#allocation10], 4
      %s643 = int_to_ptr.vmem [resolvable:$true] %s642
      %645 = dma.vmem_to_hbm [thread:$0]  %s643, 128, %s5, [#allocation6]
    $region33: #{tpu_custom_call.1} parent=1 // pred_fallthru
      _
    // Predicated region
    $region34: #{tpu_custom_call.1} parent=1 // pred_check
      _
    $region35: #{tpu_custom_call.1} parent=1 // pred_check_branch
      %647 = sbr.rel (0) target = $region37
    $region36: #{tpu_custom_call.1} parent=1 // pred_region
      %648 = dma.done [#allocation6], 128
    $region37: #{tpu_custom_call.1} parent=1 // pred_fallthru
      _
    %649 = vsyncpa [#allocation5], 1
    %650 = vsyncpa [#allocation8], 1
    %651 = vsyncpa [#allocation6], 1

</llo_original>
